<compile_context>
chip_gen: v7x
topology: tpu7x:2x2x1
jax: 0.10.0
libtpu: 0.0.40
codegen_flags: <defaults>
</compile_context>

<pallas_src>
import functools

import jax
import jax.numpy as jnp
import numpy as np
from jax.experimental import pallas as pl
from jax.experimental.pallas import tpu as pltpu


def _att_distance_kernel(q_ref, yt_ref, att_ref, sim_ref, smax_ref,
                         *, dist_norm, weight_norm, ty_valid, ty_tile):
    """q_ref: (1, TQ, D); yt_ref: (1, D, TY); att_ref: (1, TQ, TY); sim_ref: (1, TQ, 1)."""
    j = pl.program_id(2)
    n_j = pl.num_programs(2)

    @pl.when(j == 0)
    def _init():
        smax_ref[...] = jnp.full(smax_ref.shape, -jnp.inf, dtype=smax_ref.dtype)

    q = q_ref[0].astype(jnp.float32)      # (TQ, D)   tq on sublanes, d on lanes
    yt = yt_ref[0].astype(jnp.float32)    # (D, TY)   d on sublanes, ty on lanes
    tq, d_dim = q.shape
    ty = yt.shape[1]

    # Accumulate |q - y|**p over the feature axis with pure 2-D (TQ, TY) VPU ops.
    # TODO(synk): for large D switch to a chunked fori_loop instead of a full unroll.
    acc = jnp.zeros((tq, ty), jnp.float32)
    for d in range(d_dim):
        diff = q[:, d:d + 1] - yt[d:d + 1, :]          # (TQ, TY) broadcast
        if dist_norm == 1:
            term = jnp.abs(diff)
        elif dist_norm == 2:
            term = diff * diff
        else:
            term = jnp.abs(diff) ** dist_norm
        acc = acc + term

    m = acc * (1.0 / d_dim)                            # mean over D (constant scale)
    if weight_norm == 1:
        pass
    elif weight_norm == 2:
        m = m * m
    else:
        m = m ** weight_norm
    att = -m                                           # (TQ, TY)

    att_ref[0] = att.astype(att_ref.dtype)

    # Running max over ty (mask padded columns so they never win the max).
    if ty_valid % ty_tile != 0:
        col = j * ty_tile + jax.lax.broadcasted_iota(jnp.int32, (tq, ty), 1)
        att_for_max = jnp.where(col < ty_valid, att, -jnp.inf)
    else:
        att_for_max = att
    smax_ref[...] = jnp.maximum(smax_ref[...],
                                jnp.max(att_for_max, axis=-1, keepdims=True))

    @pl.when(j == n_j - 1)
    def _finalize():
        sim_ref[0] = smax_ref[...].astype(sim_ref.dtype)


def att_distance(query, y, dist_norm=1, weight_norm=1, tq_tile=None, ty_tile=None):
    """query: (B, Tq, D), y: (B, Ty, D) -> (att (B, Tq, Ty), sim (B, 1, Tq))."""
    B, Tq, D = query.shape
    B2, Ty, D2 = y.shape
    assert B == B2 and D == D2

    def rup(x, m):
        return ((x + m - 1) // m) * m

    # Lane-aligned tiles: Tq on sublanes (mult of 8), Ty on lanes (mult of 128).
    TQ = tq_tile if tq_tile is not None else min(64, rup(Tq, 8))
    TY = ty_tile if ty_tile is not None else min(512, rup(Ty, 128))
    tq_pad = rup(Tq, TQ)
    ty_pad = rup(Ty, TY)

    qp = jnp.pad(query, ((0, 0), (0, tq_pad - Tq), (0, 0)))
    yp = jnp.pad(y, ((0, 0), (0, ty_pad - Ty), (0, 0)))
    yt = jnp.swapaxes(yp, 1, 2)            # (B, D, Ty_pad): ty lane-dense in-kernel

    out_dtype = query.dtype
    kernel = functools.partial(_att_distance_kernel,
                               dist_norm=dist_norm, weight_norm=weight_norm,
                               ty_valid=Ty, ty_tile=TY)

    att_pad, sim_col = pl.pallas_call(
        kernel,
        out_shape=(
            jax.ShapeDtypeStruct((B, tq_pad, ty_pad), out_dtype),
            jax.ShapeDtypeStruct((B, tq_pad, 1), jnp.float32),
        ),
        grid_spec=pltpu.PrefetchScalarGridSpec(
            num_scalar_prefetch=0,
            grid=(B, tq_pad // TQ, ty_pad // TY),
            in_specs=[
                pl.BlockSpec((1, TQ, D), lambda b, i, j: (b, i, 0)),
                pl.BlockSpec((1, D, TY), lambda b, i, j: (b, 0, j)),
            ],
            out_specs=[
                pl.BlockSpec((1, TQ, TY), lambda b, i, j: (b, i, j)),
                pl.BlockSpec((1, TQ, 1), lambda b, i, j: (b, i, 0)),
            ],
            scratch_shapes=[pltpu.VMEM((TQ, 1), jnp.float32)],
        ),
        compiler_params=pltpu.CompilerParams(
            dimension_semantics=("parallel", "parallel", "arbitrary"),
        ),
    )(qp, yt)

    att = att_pad[:, :Tq, :Ty]
    sim = jnp.swapaxes(sim_col, 1, 2)[:, :, :Tq].astype(out_dtype)   # (B, 1, Tq)
    return att, sim


def _att_distance_ref(query, y, dist_norm=1, weight_norm=1):
    # Plain-JAX mirror of the PyTorch AttDistance forward.
    att = jnp.abs(query[:, None, :, :] - y[:, :, None, :]) ** dist_norm  # (B, Ty, Tq, D)
    att = jnp.mean(att, axis=3) ** weight_norm                           # (B, Ty, Tq)
    att = -jnp.swapaxes(att, 1, 2)                                       # (B, Tq, Ty)
    sim = jnp.max(att, axis=2)[:, None, :]                               # (B, 1, Tq)
    return att, sim


if __name__ == "__main__":
    key = jax.random.PRNGKey(0)
    kq, ky = jax.random.split(key)

    B, Tq, Ty, D = 2, 8, 16, 32
    query = jax.random.normal(kq, (B, Tq, D), dtype=jnp.float32)
    y = jax.random.normal(ky, (B, Ty, D), dtype=jnp.float32)

    # Default module configuration (dist_norm=1, weight_norm=1).
    att, sim = att_distance(query, y)
    jax.block_until_ready(att)
    jax.block_until_ready(sim)
    att_r, sim_r = _att_distance_ref(query, y)
    np.testing.assert_allclose(np.asarray(att), np.asarray(att_r), atol=1e-5, rtol=1e-5)
    np.testing.assert_allclose(np.asarray(sim), np.asarray(sim_r), atol=1e-5, rtol=1e-5)

    # Non-default norms exercise the pow paths.
    att2, sim2 = att_distance(query, y, dist_norm=2, weight_norm=2)
    jax.block_until_ready(att2)
    att2_r, sim2_r = _att_distance_ref(query, y, dist_norm=2, weight_norm=2)
    np.testing.assert_allclose(np.asarray(att2), np.asarray(att2_r), atol=1e-5, rtol=1e-5)
    np.testing.assert_allclose(np.asarray(sim2), np.asarray(sim2_r), atol=1e-5, rtol=1e-5)

    print("KERNEL_OK")
</pallas_src>

<mosaic_0001>
module attributes {stable_mosaic.version = 11 : i64} {
  func.func @_att_distance_kernel(%arg0: i32, %arg1: i32, %arg2: i32, %arg3: memref<1x8x32xf32, #tpu.memory_space<vmem>>, %arg4: memref<1x32x128xf32, #tpu.memory_space<vmem>>, %arg5: memref<1x8x128xf32, #tpu.memory_space<vmem>>, %arg6: memref<1x8x1xf32, #tpu.memory_space<vmem>>, %arg7: memref<8x1xf32, #tpu.memory_space<vmem>>) attributes {dimension_semantics = [#tpu.dimension_semantics<parallel>, #tpu.dimension_semantics<parallel>, #tpu.dimension_semantics<arbitrary>], iteration_bounds = array<i64: 2, 1, 1>, scalar_prefetch = 0 : i64, scratch_operands = 1 : i64, tpu.core_type = #tpu.core_type<tc>, window_params = [{transform_indices = @transform_0, window_bounds = array<i64: 1, 8, 32>}, {transform_indices = @transform_1, window_bounds = array<i64: 1, 32, 128>}, {transform_indices = @transform_2, window_bounds = array<i64: 1, 8, 128>}, {transform_indices = @transform_3, window_bounds = array<i64: 1, 8, 1>}]} {
    %c0_i32 = arith.constant 0 : i32
    %0 = arith.cmpi eq, %arg2, %c0_i32 : i32
    %1 = arith.extui %0 : i1 to i32
    %c0_i32_0 = arith.constant 0 : i32
    %2 = arith.cmpi ne, %1, %c0_i32_0 : i32
    scf.if %2 {
      %cst_19 = arith.constant 0xFF800000 : f32
      %255 = vector.broadcast %cst_19 : f32 to vector<8x1xf32>
      %c0_20 = arith.constant 0 : index
      %c0_21 = arith.constant 0 : index
      %256 = vector.load %arg7[%c0_20, %c0_21] : memref<8x1xf32, #tpu.memory_space<vmem>>, vector<8x1xf32>
      tpu.vector_store %arg7[%c0_20, %c0_21], %255 {strides = array<i32>} : memref<8x1xf32, #tpu.memory_space<vmem>>, vector<8x1xf32>,
    } else {
    }
    %c0 = arith.constant 0 : index
    %c0_1 = arith.constant 0 : index
    %c0_2 = arith.constant 0 : index
    %3 = vector.load %arg3[%c0, %c0_1, %c0_2] : memref<1x8x32xf32, #tpu.memory_space<vmem>>, vector<1x8x32xf32>
    %4 = vector.shape_cast %3 : vector<1x8x32xf32> to vector<8x32xf32>
    %c0_3 = arith.constant 0 : index
    %c0_4 = arith.constant 0 : index
    %c0_5 = arith.constant 0 : index
    %5 = vector.load %arg4[%c0_3, %c0_4, %c0_5] : memref<1x32x128xf32, #tpu.memory_space<vmem>>, vector<1x32x128xf32>
    %6 = vector.shape_cast %5 : vector<1x32x128xf32> to vector<32x128xf32>
    %cst = arith.constant 0.000000e+00 : f32
    %7 = vector.broadcast %cst : f32 to vector<8x128xf32>
    %8 = vector.extract_strided_slice %4 {offsets = [0, 0], sizes = [8, 1], strides = [1, 1]} : vector<8x32xf32> to vector<8x1xf32>
    %9 = vector.extract_strided_slice %6 {offsets = [0, 0], sizes = [1, 128], strides = [1, 1]} : vector<32x128xf32> to vector<1x128xf32>
    %10 = vector.broadcast %8 : vector<8x1xf32> to vector<8x128xf32>
    %11 = vector.broadcast %9 : vector<1x128xf32> to vector<8x128xf32>
    %12 = arith.subf %10, %11 : vector<8x128xf32>
    %13 = math.absf %12 : vector<8x128xf32>
    %14 = arith.addf %7, %13 : vector<8x128xf32>
    %15 = vector.extract_strided_slice %4 {offsets = [0, 1], sizes = [8, 1], strides = [1, 1]} : vector<8x32xf32> to vector<8x1xf32>
    %16 = vector.extract_strided_slice %6 {offsets = [1, 0], sizes = [1, 128], strides = [1, 1]} : vector<32x128xf32> to vector<1x128xf32>
    %17 = vector.broadcast %15 : vector<8x1xf32> to vector<8x128xf32>
    %18 = vector.broadcast %16 : vector<1x128xf32> to vector<8x128xf32>
    %19 = arith.subf %17, %18 : vector<8x128xf32>
    %20 = math.absf %19 : vector<8x128xf32>
    %21 = arith.addf %14, %20 : vector<8x128xf32>
    %22 = vector.extract_strided_slice %4 {offsets = [0, 2], sizes = [8, 1], strides = [1, 1]} : vector<8x32xf32> to vector<8x1xf32>
    %23 = vector.extract_strided_slice %6 {offsets = [2, 0], sizes = [1, 128], strides = [1, 1]} : vector<32x128xf32> to vector<1x128xf32>
    %24 = vector.broadcast %22 : vector<8x1xf32> to vector<8x128xf32>
    %25 = vector.broadcast %23 : vector<1x128xf32> to vector<8x128xf32>
    %26 = arith.subf %24, %25 : vector<8x128xf32>
    %27 = math.absf %26 : vector<8x128xf32>
    %28 = arith.addf %21, %27 : vector<8x128xf32>
    %29 = vector.extract_strided_slice %4 {offsets = [0, 3], sizes = [8, 1], strides = [1, 1]} : vector<8x32xf32> to vector<8x1xf32>
    %30 = vector.extract_strided_slice %6 {offsets = [3, 0], sizes = [1, 128], strides = [1, 1]} : vector<32x128xf32> to vector<1x128xf32>
    %31 = vector.broadcast %29 : vector<8x1xf32> to vector<8x128xf32>
    %32 = vector.broadcast %30 : vector<1x128xf32> to vector<8x128xf32>
    %33 = arith.subf %31, %32 : vector<8x128xf32>
    %34 = math.absf %33 : vector<8x128xf32>
    %35 = arith.addf %28, %34 : vector<8x128xf32>
    %36 = vector.extract_strided_slice %4 {offsets = [0, 4], sizes = [8, 1], strides = [1, 1]} : vector<8x32xf32> to vector<8x1xf32>
    %37 = vector.extract_strided_slice %6 {offsets = [4, 0], sizes = [1, 128], strides = [1, 1]} : vector<32x128xf32> to vector<1x128xf32>
    %38 = vector.broadcast %36 : vector<8x1xf32> to vector<8x128xf32>
    %39 = vector.broadcast %37 : vector<1x128xf32> to vector<8x128xf32>
    %40 = arith.subf %38, %39 : vector<8x128xf32>
    %41 = math.absf %40 : vector<8x128xf32>
    %42 = arith.addf %35, %41 : vector<8x128xf32>
    %43 = vector.extract_strided_slice %4 {offsets = [0, 5], sizes = [8, 1], strides = [1, 1]} : vector<8x32xf32> to vector<8x1xf32>
    %44 = vector.extract_strided_slice %6 {offsets = [5, 0], sizes = [1, 128], strides = [1, 1]} : vector<32x128xf32> to vector<1x128xf32>
    %45 = vector.broadcast %43 : vector<8x1xf32> to vector<8x128xf32>
    %46 = vector.broadcast %44 : vector<1x128xf32> to vector<8x128xf32>
    %47 = arith.subf %45, %46 : vector<8x128xf32>
    %48 = math.absf %47 : vector<8x128xf32>
    %49 = arith.addf %42, %48 : vector<8x128xf32>
    %50 = vector.extract_strided_slice %4 {offsets = [0, 6], sizes = [8, 1], strides = [1, 1]} : vector<8x32xf32> to vector<8x1xf32>
    %51 = vector.extract_strided_slice %6 {offsets = [6, 0], sizes = [1, 128], strides = [1, 1]} : vector<32x128xf32> to vector<1x128xf32>
    %52 = vector.broadcast %50 : vector<8x1xf32> to vector<8x128xf32>
    %53 = vector.broadcast %51 : vector<1x128xf32> to vector<8x128xf32>
    %54 = arith.subf %52, %53 : vector<8x128xf32>
    %55 = math.absf %54 : vector<8x128xf32>
    %56 = arith.addf %49, %55 : vector<8x128xf32>
    %57 = vector.extract_strided_slice %4 {offsets = [0, 7], sizes = [8, 1], strides = [1, 1]} : vector<8x32xf32> to vector<8x1xf32>
    %58 = vector.extract_strided_slice %6 {offsets = [7, 0], sizes = [1, 128], strides = [1, 1]} : vector<32x128xf32> to vector<1x128xf32>
    %59 = vector.broadcast %57 : vector<8x1xf32> to vector<8x128xf32>
    %60 = vector.broadcast %58 : vector<1x128xf32> to vector<8x128xf32>
    %61 = arith.subf %59, %60 : vector<8x128xf32>
    %62 = math.absf %61 : vector<8x128xf32>
    %63 = arith.addf %56, %62 : vector<8x128xf32>
    %64 = vector.extract_strided_slice %4 {offsets = [0, 8], sizes = [8, 1], strides = [1, 1]} : vector<8x32xf32> to vector<8x1xf32>
    %65 = vector.extract_strided_slice %6 {offsets = [8, 0], sizes = [1, 128], strides = [1, 1]} : vector<32x128xf32> to vector<1x128xf32>
    %66 = vector.broadcast %64 : vector<8x1xf32> to vector<8x128xf32>
    %67 = vector.broadcast %65 : vector<1x128xf32> to vector<8x128xf32>
    %68 = arith.subf %66, %67 : vector<8x128xf32>
    %69 = math.absf %68 : vector<8x128xf32>
    %70 = arith.addf %63, %69 : vector<8x128xf32>
    %71 = vector.extract_strided_slice %4 {offsets = [0, 9], sizes = [8, 1], strides = [1, 1]} : vector<8x32xf32> to vector<8x1xf32>
    %72 = vector.extract_strided_slice %6 {offsets = [9, 0], sizes = [1, 128], strides = [1, 1]} : vector<32x128xf32> to vector<1x128xf32>
    %73 = vector.broadcast %71 : vector<8x1xf32> to vector<8x128xf32>
    %74 = vector.broadcast %72 : vector<1x128xf32> to vector<8x128xf32>
    %75 = arith.subf %73, %74 : vector<8x128xf32>
    %76 = math.absf %75 : vector<8x128xf32>
    %77 = arith.addf %70, %76 : vector<8x128xf32>
    %78 = vector.extract_strided_slice %4 {offsets = [0, 10], sizes = [8, 1], strides = [1, 1]} : vector<8x32xf32> to vector<8x1xf32>
    %79 = vector.extract_strided_slice %6 {offsets = [10, 0], sizes = [1, 128], strides = [1, 1]} : vector<32x128xf32> to vector<1x128xf32>
    %80 = vector.broadcast %78 : vector<8x1xf32> to vector<8x128xf32>
    %81 = vector.broadcast %79 : vector<1x128xf32> to vector<8x128xf32>
    %82 = arith.subf %80, %81 : vector<8x128xf32>
    %83 = math.absf %82 : vector<8x128xf32>
    %84 = arith.addf %77, %83 : vector<8x128xf32>
    %85 = vector.extract_strided_slice %4 {offsets = [0, 11], sizes = [8, 1], strides = [1, 1]} : vector<8x32xf32> to vector<8x1xf32>
    %86 = vector.extract_strided_slice %6 {offsets = [11, 0], sizes = [1, 128], strides = [1, 1]} : vector<32x128xf32> to vector<1x128xf32>
    %87 = vector.broadcast %85 : vector<8x1xf32> to vector<8x128xf32>
    %88 = vector.broadcast %86 : vector<1x128xf32> to vector<8x128xf32>
    %89 = arith.subf %87, %88 : vector<8x128xf32>
    %90 = math.absf %89 : vector<8x128xf32>
    %91 = arith.addf %84, %90 : vector<8x128xf32>
    %92 = vector.extract_strided_slice %4 {offsets = [0, 12], sizes = [8, 1], strides = [1, 1]} : vector<8x32xf32> to vector<8x1xf32>
    %93 = vector.extract_strided_slice %6 {offsets = [12, 0], sizes = [1, 128], strides = [1, 1]} : vector<32x128xf32> to vector<1x128xf32>
    %94 = vector.broadcast %92 : vector<8x1xf32> to vector<8x128xf32>
    %95 = vector.broadcast %93 : vector<1x128xf32> to vector<8x128xf32>
    %96 = arith.subf %94, %95 : vector<8x128xf32>
    %97 = math.absf %96 : vector<8x128xf32>
    %98 = arith.addf %91, %97 : vector<8x128xf32>
    %99 = vector.extract_strided_slice %4 {offsets = [0, 13], sizes = [8, 1], strides = [1, 1]} : vector<8x32xf32> to vector<8x1xf32>
    %100 = vector.extract_strided_slice %6 {offsets = [13, 0], sizes = [1, 128], strides = [1, 1]} : vector<32x128xf32> to vector<1x128xf32>
    %101 = vector.broadcast %99 : vector<8x1xf32> to vector<8x128xf32>
    %102 = vector.broadcast %100 : vector<1x128xf32> to vector<8x128xf32>
    %103 = arith.subf %101, %102 : vector<8x128xf32>
    %104 = math.absf %103 : vector<8x128xf32>
    %105 = arith.addf %98, %104 : vector<8x128xf32>
    %106 = vector.extract_strided_slice %4 {offsets = [0, 14], sizes = [8, 1], strides = [1, 1]} : vector<8x32xf32> to vector<8x1xf32>
    %107 = vector.extract_strided_slice %6 {offsets = [14, 0], sizes = [1, 128], strides = [1, 1]} : vector<32x128xf32> to vector<1x128xf32>
    %108 = vector.broadcast %106 : vector<8x1xf32> to vector<8x128xf32>
    %109 = vector.broadcast %107 : vector<1x128xf32> to vector<8x128xf32>
    %110 = arith.subf %108, %109 : vector<8x128xf32>
    %111 = math.absf %110 : vector<8x128xf32>
    %112 = arith.addf %105, %111 : vector<8x128xf32>
    %113 = vector.extract_strided_slice %4 {offsets = [0, 15], sizes = [8, 1], strides = [1, 1]} : vector<8x32xf32> to vector<8x1xf32>
    %114 = vector.extract_strided_slice %6 {offsets = [15, 0], sizes = [1, 128], strides = [1, 1]} : vector<32x128xf32> to vector<1x128xf32>
    %115 = vector.broadcast %113 : vector<8x1xf32> to vector<8x128xf32>
    %116 = vector.broadcast %114 : vector<1x128xf32> to vector<8x128xf32>
    %117 = arith.subf %115, %116 : vector<8x128xf32>
    %118 = math.absf %117 : vector<8x128xf32>
    %119 = arith.addf %112, %118 : vector<8x128xf32>
    %120 = vector.extract_strided_slice %4 {offsets = [0, 16], sizes = [8, 1], strides = [1, 1]} : vector<8x32xf32> to vector<8x1xf32>
    %121 = vector.extract_strided_slice %6 {offsets = [16, 0], sizes = [1, 128], strides = [1, 1]} : vector<32x128xf32> to vector<1x128xf32>
    %122 = vector.broadcast %120 : vector<8x1xf32> to vector<8x128xf32>
    %123 = vector.broadcast %121 : vector<1x128xf32> to vector<8x128xf32>
    %124 = arith.subf %122, %123 : vector<8x128xf32>
    %125 = math.absf %124 : vector<8x128xf32>
    %126 = arith.addf %119, %125 : vector<8x128xf32>
    %127 = vector.extract_strided_slice %4 {offsets = [0, 17], sizes = [8, 1], strides = [1, 1]} : vector<8x32xf32> to vector<8x1xf32>
    %128 = vector.extract_strided_slice %6 {offsets = [17, 0], sizes = [1, 128], strides = [1, 1]} : vector<32x128xf32> to vector<1x128xf32>
    %129 = vector.broadcast %127 : vector<8x1xf32> to vector<8x128xf32>
    %130 = vector.broadcast %128 : vector<1x128xf32> to vector<8x128xf32>
    %131 = arith.subf %129, %130 : vector<8x128xf32>
    %132 = math.absf %131 : vector<8x128xf32>
    %133 = arith.addf %126, %132 : vector<8x128xf32>
    %134 = vector.extract_strided_slice %4 {offsets = [0, 18], sizes = [8, 1], strides = [1, 1]} : vector<8x32xf32> to vector<8x1xf32>
    %135 = vector.extract_strided_slice %6 {offsets = [18, 0], sizes = [1, 128], strides = [1, 1]} : vector<32x128xf32> to vector<1x128xf32>
    %136 = vector.broadcast %134 : vector<8x1xf32> to vector<8x128xf32>
    %137 = vector.broadcast %135 : vector<1x128xf32> to vector<8x128xf32>
    %138 = arith.subf %136, %137 : vector<8x128xf32>
    %139 = math.absf %138 : vector<8x128xf32>
    %140 = arith.addf %133, %139 : vector<8x128xf32>
    %141 = vector.extract_strided_slice %4 {offsets = [0, 19], sizes = [8, 1], strides = [1, 1]} : vector<8x32xf32> to vector<8x1xf32>
    %142 = vector.extract_strided_slice %6 {offsets = [19, 0], sizes = [1, 128], strides = [1, 1]} : vector<32x128xf32> to vector<1x128xf32>
    %143 = vector.broadcast %141 : vector<8x1xf32> to vector<8x128xf32>
    %144 = vector.broadcast %142 : vector<1x128xf32> to vector<8x128xf32>
    %145 = arith.subf %143, %144 : vector<8x128xf32>
    %146 = math.absf %145 : vector<8x128xf32>
    %147 = arith.addf %140, %146 : vector<8x128xf32>
    %148 = vector.extract_strided_slice %4 {offsets = [0, 20], sizes = [8, 1], strides = [1, 1]} : vector<8x32xf32> to vector<8x1xf32>
    %149 = vector.extract_strided_slice %6 {offsets = [20, 0], sizes = [1, 128], strides = [1, 1]} : vector<32x128xf32> to vector<1x128xf32>
    %150 = vector.broadcast %148 : vector<8x1xf32> to vector<8x128xf32>
    %151 = vector.broadcast %149 : vector<1x128xf32> to vector<8x128xf32>
    %152 = arith.subf %150, %151 : vector<8x128xf32>
    %153 = math.absf %152 : vector<8x128xf32>
    %154 = arith.addf %147, %153 : vector<8x128xf32>
    %155 = vector.extract_strided_slice %4 {offsets = [0, 21], sizes = [8, 1], strides = [1, 1]} : vector<8x32xf32> to vector<8x1xf32>
    %156 = vector.extract_strided_slice %6 {offsets = [21, 0], sizes = [1, 128], strides = [1, 1]} : vector<32x128xf32> to vector<1x128xf32>
    %157 = vector.broadcast %155 : vector<8x1xf32> to vector<8x128xf32>
    %158 = vector.broadcast %156 : vector<1x128xf32> to vector<8x128xf32>
    %159 = arith.subf %157, %158 : vector<8x128xf32>
    %160 = math.absf %159 : vector<8x128xf32>
    %161 = arith.addf %154, %160 : vector<8x128xf32>
    %162 = vector.extract_strided_slice %4 {offsets = [0, 22], sizes = [8, 1], strides = [1, 1]} : vector<8x32xf32> to vector<8x1xf32>
    %163 = vector.extract_strided_slice %6 {offsets = [22, 0], sizes = [1, 128], strides = [1, 1]} : vector<32x128xf32> to vector<1x128xf32>
    %164 = vector.broadcast %162 : vector<8x1xf32> to vector<8x128xf32>
    %165 = vector.broadcast %163 : vector<1x128xf32> to vector<8x128xf32>
    %166 = arith.subf %164, %165 : vector<8x128xf32>
    %167 = math.absf %166 : vector<8x128xf32>
    %168 = arith.addf %161, %167 : vector<8x128xf32>
    %169 = vector.extract_strided_slice %4 {offsets = [0, 23], sizes = [8, 1], strides = [1, 1]} : vector<8x32xf32> to vector<8x1xf32>
    %170 = vector.extract_strided_slice %6 {offsets = [23, 0], sizes = [1, 128], strides = [1, 1]} : vector<32x128xf32> to vector<1x128xf32>
    %171 = vector.broadcast %169 : vector<8x1xf32> to vector<8x128xf32>
    %172 = vector.broadcast %170 : vector<1x128xf32> to vector<8x128xf32>
    %173 = arith.subf %171, %172 : vector<8x128xf32>
    %174 = math.absf %173 : vector<8x128xf32>
    %175 = arith.addf %168, %174 : vector<8x128xf32>
    %176 = vector.extract_strided_slice %4 {offsets = [0, 24], sizes = [8, 1], strides = [1, 1]} : vector<8x32xf32> to vector<8x1xf32>
    %177 = vector.extract_strided_slice %6 {offsets = [24, 0], sizes = [1, 128], strides = [1, 1]} : vector<32x128xf32> to vector<1x128xf32>
    %178 = vector.broadcast %176 : vector<8x1xf32> to vector<8x128xf32>
    %179 = vector.broadcast %177 : vector<1x128xf32> to vector<8x128xf32>
    %180 = arith.subf %178, %179 : vector<8x128xf32>
    %181 = math.absf %180 : vector<8x128xf32>
    %182 = arith.addf %175, %181 : vector<8x128xf32>
    %183 = vector.extract_strided_slice %4 {offsets = [0, 25], sizes = [8, 1], strides = [1, 1]} : vector<8x32xf32> to vector<8x1xf32>
    %184 = vector.extract_strided_slice %6 {offsets = [25, 0], sizes = [1, 128], strides = [1, 1]} : vector<32x128xf32> to vector<1x128xf32>
    %185 = vector.broadcast %183 : vector<8x1xf32> to vector<8x128xf32>
    %186 = vector.broadcast %184 : vector<1x128xf32> to vector<8x128xf32>
    %187 = arith.subf %185, %186 : vector<8x128xf32>
    %188 = math.absf %187 : vector<8x128xf32>
    %189 = arith.addf %182, %188 : vector<8x128xf32>
    %190 = vector.extract_strided_slice %4 {offsets = [0, 26], sizes = [8, 1], strides = [1, 1]} : vector<8x32xf32> to vector<8x1xf32>
    %191 = vector.extract_strided_slice %6 {offsets = [26, 0], sizes = [1, 128], strides = [1, 1]} : vector<32x128xf32> to vector<1x128xf32>
    %192 = vector.broadcast %190 : vector<8x1xf32> to vector<8x128xf32>
    %193 = vector.broadcast %191 : vector<1x128xf32> to vector<8x128xf32>
    %194 = arith.subf %192, %193 : vector<8x128xf32>
    %195 = math.absf %194 : vector<8x128xf32>
    %196 = arith.addf %189, %195 : vector<8x128xf32>
    %197 = vector.extract_strided_slice %4 {offsets = [0, 27], sizes = [8, 1], strides = [1, 1]} : vector<8x32xf32> to vector<8x1xf32>
    %198 = vector.extract_strided_slice %6 {offsets = [27, 0], sizes = [1, 128], strides = [1, 1]} : vector<32x128xf32> to vector<1x128xf32>
    %199 = vector.broadcast %197 : vector<8x1xf32> to vector<8x128xf32>
    %200 = vector.broadcast %198 : vector<1x128xf32> to vector<8x128xf32>
    %201 = arith.subf %199, %200 : vector<8x128xf32>
    %202 = math.absf %201 : vector<8x128xf32>
    %203 = arith.addf %196, %202 : vector<8x128xf32>
    %204 = vector.extract_strided_slice %4 {offsets = [0, 28], sizes = [8, 1], strides = [1, 1]} : vector<8x32xf32> to vector<8x1xf32>
    %205 = vector.extract_strided_slice %6 {offsets = [28, 0], sizes = [1, 128], strides = [1, 1]} : vector<32x128xf32> to vector<1x128xf32>
    %206 = vector.broadcast %204 : vector<8x1xf32> to vector<8x128xf32>
    %207 = vector.broadcast %205 : vector<1x128xf32> to vector<8x128xf32>
    %208 = arith.subf %206, %207 : vector<8x128xf32>
    %209 = math.absf %208 : vector<8x128xf32>
    %210 = arith.addf %203, %209 : vector<8x128xf32>
    %211 = vector.extract_strided_slice %4 {offsets = [0, 29], sizes = [8, 1], strides = [1, 1]} : vector<8x32xf32> to vector<8x1xf32>
    %212 = vector.extract_strided_slice %6 {offsets = [29, 0], sizes = [1, 128], strides = [1, 1]} : vector<32x128xf32> to vector<1x128xf32>
    %213 = vector.broadcast %211 : vector<8x1xf32> to vector<8x128xf32>
    %214 = vector.broadcast %212 : vector<1x128xf32> to vector<8x128xf32>
    %215 = arith.subf %213, %214 : vector<8x128xf32>
    %216 = math.absf %215 : vector<8x128xf32>
    %217 = arith.addf %210, %216 : vector<8x128xf32>
    %218 = vector.extract_strided_slice %4 {offsets = [0, 30], sizes = [8, 1], strides = [1, 1]} : vector<8x32xf32> to vector<8x1xf32>
    %219 = vector.extract_strided_slice %6 {offsets = [30, 0], sizes = [1, 128], strides = [1, 1]} : vector<32x128xf32> to vector<1x128xf32>
    %220 = vector.broadcast %218 : vector<8x1xf32> to vector<8x128xf32>
    %221 = vector.broadcast %219 : vector<1x128xf32> to vector<8x128xf32>
    %222 = arith.subf %220, %221 : vector<8x128xf32>
    %223 = math.absf %222 : vector<8x128xf32>
    %224 = arith.addf %217, %223 : vector<8x128xf32>
    %225 = vector.extract_strided_slice %4 {offsets = [0, 31], sizes = [8, 1], strides = [1, 1]} : vector<8x32xf32> to vector<8x1xf32>
    %226 = vector.extract_strided_slice %6 {offsets = [31, 0], sizes = [1, 128], strides = [1, 1]} : vector<32x128xf32> to vector<1x128xf32>
    %227 = vector.broadcast %225 : vector<8x1xf32> to vector<8x128xf32>
    %228 = vector.broadcast %226 : vector<1x128xf32> to vector<8x128xf32>
    %229 = arith.subf %227, %228 : vector<8x128xf32>
    %230 = math.absf %229 : vector<8x128xf32>
    %231 = arith.addf %224, %230 : vector<8x128xf32>
    %cst_6 = arith.constant 3.125000e-02 : f32
    %232 = vector.broadcast %cst_6 : f32 to vector<8x128xf32>
    %233 = arith.mulf %231, %232 : vector<8x128xf32>
    %cst_7 = arith.constant 0.000000e+00 : f32
    %234 = vector.broadcast %cst_7 : f32 to vector<8x128xf32>
    %235 = arith.subf %234, %233 : vector<8x128xf32>
    %c0_8 = arith.constant 0 : index
    %c0_9 = arith.constant 0 : index
    %c0_10 = arith.constant 0 : index
    %236 = vector.load %arg5[%c0_8, %c0_9, %c0_10] : memref<1x8x128xf32, #tpu.memory_space<vmem>>, vector<1x8x128xf32>
    %237 = vector.shape_cast %236 : vector<1x8x128xf32> to vector<8x128xf32>
    %238 = vector.shape_cast %235 : vector<8x128xf32> to vector<1x8x128xf32>
    tpu.vector_store %arg5[%c0_8, %c0_9, %c0_10], %238 {strides = array<i32>} : memref<1x8x128xf32, #tpu.memory_space<vmem>>, vector<1x8x128xf32>,
    %c128_i32 = arith.constant 128 : i32
    %239 = arith.muli %arg2, %c128_i32 : i32
    %240 = tpu.iota {dimensions = array<i32: 1>} : vector<8x128xi32>
    %241 = vector.broadcast %239 : i32 to vector<8x128xi32>
    %242 = arith.addi %241, %240 : vector<8x128xi32>
    %c16_i32 = arith.constant 16 : i32
    %243 = vector.broadcast %c16_i32 : i32 to vector<8x128xi32>
    %244 = arith.cmpi slt, %242, %243 : vector<8x128xi32>
    %cst_11 = arith.constant 0xFF800000 : f32
    %245 = vector.broadcast %cst_11 : f32 to vector<8x128xf32>
    %246 = arith.select %244, %235, %245 : vector<8x128xi1>, vector<8x128xf32>
    %c0_12 = arith.constant 0 : index
    %c0_13 = arith.constant 0 : index
    %247 = vector.load %arg7[%c0_12, %c0_13] : memref<8x1xf32, #tpu.memory_space<vmem>>, vector<8x1xf32>
    %cst_14 = arith.constant dense<0xFF800000> : vector<8xf32>
    %248 = vector.multi_reduction <maximumf>, %246, %cst_14 [1] : vector<8x128xf32> to vector<8xf32>
    %249 = vector.shape_cast %248 : vector<8xf32> to vector<8x1xf32>
    %250 = arith.maximumf %247, %249 : vector<8x1xf32>
    %c0_15 = arith.constant 0 : index
    %c0_16 = arith.constant 0 : index
    %251 = vector.load %arg7[%c0_15, %c0_16] : memref<8x1xf32, #tpu.memory_space<vmem>>, vector<8x1xf32>
    tpu.vector_store %arg7[%c0_15, %c0_16], %250 {strides = array<i32>} : memref<8x1xf32, #tpu.memory_space<vmem>>, vector<8x1xf32>,
    %c0_i32_17 = arith.constant 0 : i32
    %252 = arith.cmpi eq, %arg2, %c0_i32_17 : i32
    %253 = arith.extui %252 : i1 to i32
    %c0_i32_18 = arith.constant 0 : i32
    %254 = arith.cmpi ne, %253, %c0_i32_18 : i32
    scf.if %254 {
      %c0_19 = arith.constant 0 : index
      %c0_20 = arith.constant 0 : index
      %255 = vector.load %arg7[%c0_19, %c0_20] : memref<8x1xf32, #tpu.memory_space<vmem>>, vector<8x1xf32>
      %c0_21 = arith.constant 0 : index
      %c0_22 = arith.constant 0 : index
      %c0_23 = arith.constant 0 : index
      %256 = vector.load %arg6[%c0_21, %c0_22, %c0_23] : memref<1x8x1xf32, #tpu.memory_space<vmem>>, vector<1x8x1xf32>
      %257 = vector.shape_cast %256 : vector<1x8x1xf32> to vector<8x1xf32>
      %258 = vector.shape_cast %255 : vector<8x1xf32> to vector<1x8x1xf32>
      tpu.vector_store %arg6[%c0_21, %c0_22, %c0_23], %258 {strides = array<i32>} : memref<1x8x1xf32, #tpu.memory_space<vmem>>, vector<1x8x1xf32>,
    } else {
    }
    return
  }
  func.func @transform_0(%arg0: i32, %arg1: i32, %arg2: i32) -> (i32, i32, i32) {
    %c0_i32 = arith.constant 0 : i32
    %c0_i32_0 = arith.constant 0 : i32
    return %arg0, %arg1, %c0_i32 : i32, i32, i32
  }
  func.func @transform_1(%arg0: i32, %arg1: i32, %arg2: i32) -> (i32, i32, i32) {
    %c0_i32 = arith.constant 0 : i32
    %c0_i32_0 = arith.constant 0 : i32
    return %arg0, %c0_i32, %arg2 : i32, i32, i32
  }
  func.func @transform_2(%arg0: i32, %arg1: i32, %arg2: i32) -> (i32, i32, i32) {
    %c0_i32 = arith.constant 0 : i32
    return %arg0, %arg1, %arg2 : i32, i32, i32
  }
  func.func @transform_3(%arg0: i32, %arg1: i32, %arg2: i32) -> (i32, i32, i32) {
    %c0_i32 = arith.constant 0 : i32
    %c0_i32_0 = arith.constant 0 : i32
    return %arg0, %arg1, %c0_i32 : i32, i32, i32
  }
}

</mosaic_0001>

<llo_original>
// kernel: tpu_custom_call.1
$region0: #{tpu_custom_call.1}
  #allocation0 [shape = 'u32[]', space=smem, size = 0x4, offset = 0x4, fixed_abs, tag = 'smem constant byte address 0x4 - core index']
  #allocation1 [shape = 'u32[144,128]{1,0:T(1,128)}', space=vmem, size = 0x12000, scoped, tag = 'internal scratch']
  #allocation2 [shape = 'f32[8,1]{1,0:T(8,128)}', space=vmem, size = 0x1000, scoped, tag = 'scratch operand']
  %s0 = inlined_call_operand.hbm [shape: f32[2,8,32], index: 0, kind: input, shape index: {}]
  %s1 = inlined_call_operand.hbm [shape: f32[2,32,128], index: 1, kind: input, shape index: {}]
  %s2 = inlined_call_operand.hbm [shape: f32[2,8,128], index: 2, kind: output, shape index: {0}]
  %s3 = inlined_call_operand.vmem [shape: f32[2,8,1], index: 3, kind: output, shape index: {1}]
  %4 = xla_tuple %s2, %s3
  %s5 = sld [smem:[#allocation0]]
  $region65: #{tpu_custom_call.1} parent=0
    _
  %s7 = ssub.s32 1, %s5
  %s8 = scalar_select 0, %s7, %s5
  $region1: #{tpu_custom_call.1} parent=0
    #allocation3 [shape = 'u8[8192]{0}', space=vmem, size = 0x2000, scoped, tag = 'input window, operand 0']
    #allocation4 [shape = 's32[2]{0}', space=sflag, size = 0x8, scoped, tag = 'scoped memory for tpu_custom_call.1']
    #allocation5 [shape = 's32[2]{0}', space=sflag, size = 0x8, scoped, tag = 'scoped memory for tpu_custom_call.1']
    #allocation6 [shape = 'u8[32768]{0}', space=vmem, size = 0x8000, scoped, tag = 'input window, operand 1']
    #allocation7 [shape = 's32[2]{0}', space=sflag, size = 0x8, scoped, tag = 'scoped memory for tpu_custom_call.1']
    #allocation8 [shape = 'u8[8192]{0}', space=vmem, size = 0x2000, scoped, tag = 'output window, operand 0']
    %9 = vsyncpa [#allocation4], 0
    %s10 = scalar_lea.sflag [#allocation4], 1
    %11 = vsyncpa %s10, 0
    %12 = vsyncpa [#allocation7], 0
    %s13 = scalar_lea.sflag [#allocation7], 1
    %14 = vsyncpa %s13, 0
    %15 = vsyncpa [#allocation5], 0
    %s16 = scalar_lea.sflag [#allocation5], 1
    %17 = vsyncpa %s16, 0
    loop: start=0, step=1, limit=4
    $region2: #{tpu_custom_call.1} parent=1 // loop_pre_header
      _
    $region3: #{tpu_custom_call.1} parent=1 // loop_header
      %s19 = sphi 0, %s23
      %p20 = scmp.ge.s32.totalorder %s19, 4
      %s26 = sphi 0, %s45
      %s27 = sphi 0, %s41
      %s28 = sphi 0, %s37
      %s29 = sphi 0, %s26
      %s30 = sphi 0, %s27
      %s31 = sphi 0, %s28
      %s32 = sphi 0, %s29
      %s33 = sphi 0, %s30
      %s34 = sphi 0, %s31
      %s50 = sphi 0, %s52
      %s53 = sphi 0, %s50
      %s54 = sphi 0, %s53
      %s70 = sphi 0, %s54
      %s78 = sphi 0, %s80
      %s81 = sphi 0, %s78
      %s82 = sphi 0, %s81
      %s98 = sphi 0, %s82
      %s108 = sphi 0, %s110
      %s111 = sphi 0, %s108
      %s112 = sphi 0, %s111
      %s128 = sphi 0, %s112
      %s136 = sphi 0, %s138
      %s139 = sphi 0, %s136
      %s140 = sphi 0, %s139
      %s156 = sphi 0, %s140
    $region4: #{tpu_custom_call.1} parent=1 // loop_header_branch
      %22 = sbr.rel (%p20) target = $region8
    $region5: #{tpu_custom_call.1} parent=1 // loop_body
      %s24 = ssub.s32 %s19, 1
      %s25 = ssub.s32 %s19, 2
      %s35 = sadd.s32 1, %s28
      %p36 = scmp.ge.s32.totalorder %s35, 1
      %s37 = scalar_select %p36, 0, %s35
      %s38 = sadd.s32 1, %s27
      %s39 = scalar_select %p36, %s38, %s27
      %p40 = scmp.ge.s32.totalorder %s39, 1
      %s41 = scalar_select %p40, 0, %s39
      %s42 = sadd.s32 1, %s26
      %s43 = scalar_select %p40, %s42, %s26
      %p44 = scmp.ge.s32.totalorder %s43, 2
      %s45 = scalar_select %p44, 0, %s43
      %s46 = ssub.s32 %s26, %s45
      %s47 = ssub.s32 %s27, %s41
      %s48 = sor.u32 %s46, %s47
      %p49 = scmp.eq.s32.totalorder %s48, 0
      %s51 = sadd.s32 %s50, 1
      %s52 = scalar_select %p49, %s50, %s51
      %p55 = pneg %p49
      %p56 = scmp.eq.s32.totalorder %s19, 1
      %p57 = por %p55, %p56
      %p58 = scmp.ne.s32.totalorder %s50, %s53
      %p59 = scmp.eq.s32.totalorder %s19, 0
      %p60 = por %p58, %p59
      %p61 = scmp.ne.s32.totalorder %s50, %s53
      %p62 = scmp.eq.s32.totalorder %s24, 1
      %p63 = por %p61, %p62
      %p64 = scmp.ne.s32.totalorder %s53, %s54
      %p65 = scmp.eq.s32.totalorder %s24, 0
      %p66 = por %p64, %p65
      %p67 = scmp.ne.s32.totalorder %s53, %s54
      %p68 = scmp.eq.s32.totalorder %s25, 1
      %p69 = por %p67, %p68
      %p71 = scmp.ne.s32.totalorder %s54, %s70
      %p72 = scmp.eq.s32.totalorder %s25, 0
      %p73 = por %p71, %p72
      %s74 = ssub.s32 %s26, %s45
      %s75 = ssub.s32 %s28, %s37
      %s76 = sor.u32 %s74, %s75
      %p77 = scmp.eq.s32.totalorder %s76, 0
      %s79 = sadd.s32 %s78, 1
      %s80 = scalar_select %p77, %s78, %s79
      %p83 = pneg %p77
      %p84 = scmp.eq.s32.totalorder %s19, 1
      %p85 = por %p83, %p84
      %p86 = scmp.ne.s32.totalorder %s78, %s81
      %p87 = scmp.eq.s32.totalorder %s19, 0
      %p88 = por %p86, %p87
      %p89 = scmp.ne.s32.totalorder %s78, %s81
      %p90 = scmp.eq.s32.totalorder %s24, 1
      %p91 = por %p89, %p90
      %p92 = scmp.ne.s32.totalorder %s81, %s82
      %p93 = scmp.eq.s32.totalorder %s24, 0
      %p94 = por %p92, %p93
      %p95 = scmp.ne.s32.totalorder %s81, %s82
      %p96 = scmp.eq.s32.totalorder %s25, 1
      %p97 = por %p95, %p96
      %p99 = scmp.ne.s32.totalorder %s82, %s98
      %p100 = scmp.eq.s32.totalorder %s25, 0
      %p101 = por %p99, %p100
      %s102 = ssub.s32 %s26, %s45
      %s103 = ssub.s32 %s27, %s41
      %s104 = sor.u32 %s102, %s103
      %s105 = ssub.s32 %s28, %s37
      %s106 = sor.u32 %s104, %s105
      %p107 = scmp.eq.s32.totalorder %s106, 0
      %s109 = sadd.s32 %s108, 1
      %s110 = scalar_select %p107, %s108, %s109
      %p113 = pneg %p107
      %p114 = scmp.eq.s32.totalorder %s19, 1
      %p115 = por %p113, %p114
      %p116 = scmp.ne.s32.totalorder %s108, %s111
      %p117 = scmp.eq.s32.totalorder %s19, 0
      %p118 = por %p116, %p117
      %p119 = scmp.ne.s32.totalorder %s108, %s111
      %p120 = scmp.eq.s32.totalorder %s24, 1
      %p121 = por %p119, %p120
      %p122 = scmp.ne.s32.totalorder %s111, %s112
      %p123 = scmp.eq.s32.totalorder %s24, 0
      %p124 = por %p122, %p123
      %p125 = scmp.ne.s32.totalorder %s111, %s112
      %p126 = scmp.eq.s32.totalorder %s25, 1
      %p127 = por %p125, %p126
      %p129 = scmp.ne.s32.totalorder %s112, %s128
      %p130 = scmp.eq.s32.totalorder %s25, 0
      %p131 = por %p129, %p130
      %s132 = ssub.s32 %s26, %s45
      %s133 = ssub.s32 %s27, %s41
      %s134 = sor.u32 %s132, %s133
      %p135 = scmp.eq.s32.totalorder %s134, 0
      %s137 = sadd.s32 %s136, 1
      %s138 = scalar_select %p135, %s136, %s137
      %p141 = pneg %p135
      %p142 = scmp.eq.s32.totalorder %s19, 1
      %p143 = por %p141, %p142
      %p144 = scmp.ne.s32.totalorder %s136, %s139
      %p145 = scmp.eq.s32.totalorder %s19, 0
      %p146 = por %p144, %p145
      %p147 = scmp.ne.s32.totalorder %s136, %s139
      %p148 = scmp.eq.s32.totalorder %s24, 1
      %p149 = por %p147, %p148
      %p150 = scmp.ne.s32.totalorder %s139, %s140
      %p151 = scmp.eq.s32.totalorder %s24, 0
      %p152 = por %p150, %p151
      %p153 = scmp.ne.s32.totalorder %s139, %s140
      %p154 = scmp.eq.s32.totalorder %s25, 1
      %p155 = por %p153, %p154
      %p157 = scmp.ne.s32.totalorder %s140, %s156
      %p158 = scmp.eq.s32.totalorder %s25, 0
      %p159 = por %p157, %p158
      %p160 = scmp.le.s32.totalorder 1, %s19
      %p161 = scmp.lt.s32.totalorder %s19, 3
      %p162 = pnand %p160, %p161
      %p163 = pneg %p162
      // Predicated region
      $region9: #{tpu_custom_call.1} parent=5 // pred_check
        _
      $region10: #{tpu_custom_call.1} parent=5 // pred_check_branch
        %165 = sbr.rel (%p162) target = $region12
      $region11: #{tpu_custom_call.1} parent=5 // pred_region
        %s166 = ssub.s32 %s19, 1
      $region12: #{tpu_custom_call.1} parent=5 // pred_fallthru
        _
      %p167 = scmp.lt.s32.totalorder %s19, 2
      // Predicated region
      $region13: #{tpu_custom_call.1} parent=5 // pred_check
        %p168 = pneg %p167
      $region14: #{tpu_custom_call.1} parent=5 // pred_check_branch
        %170 = sbr.rel (%p168) target = $region16
      $region15: #{tpu_custom_call.1} parent=5 // pred_region
        // Predicated region
        $region17: #{tpu_custom_call.1} parent=15 // pred_check
          %p171 = pneg %p60
        $region18: #{tpu_custom_call.1} parent=15 // pred_check_branch
          %173 = sbr.rel (%p171) target = $region20
        $region19: #{tpu_custom_call.1} parent=15 // pred_region
          %s174 = sand.u32 %s50, 1
          %s175 = scalar_lea.sflag [#allocation4], %s174
          %s176 = sand.u32 %s50, 1
          %s177 = smul.addr %s176, 8
          %s178 = scalar_lea.vmem [#allocation3], %s177
          %s180 = ssub.s32 128, 128
          %181 = vsyncadd %s175, %s180
          %s182 = sadd.s32 %s27, %s26
          %s183 = smul.addr %s182, 128
          %s184 = scalar_lea.hbm %s0, %s183
          %s186 = sshll.u32 %s178, 4
          %s187 = int_to_ptr.vmem [resolvable:$true] %s186
          %189 = dma.hbm_to_vmem [thread:$0]  %s184, 128, %s187, %s175
        $region20: #{tpu_custom_call.1} parent=15 // pred_fallthru
          _
        // Predicated region
        $region21: #{tpu_custom_call.1} parent=15 // pred_check
          %p190 = pneg %p88
        $region22: #{tpu_custom_call.1} parent=15 // pred_check_branch
          %192 = sbr.rel (%p190) target = $region24
        $region23: #{tpu_custom_call.1} parent=15 // pred_region
          %s193 = sand.u32 %s78, 1
          %s194 = scalar_lea.sflag [#allocation7], %s193
          %s195 = sand.u32 %s78, 1
          %s196 = smul.addr %s195, 32
          %s197 = scalar_lea.vmem [#allocation6], %s196
          %s199 = ssub.s32 512, 512
          %200 = vsyncadd %s194, %s199
          %s201 = smul.addr %s26, 4
          %s202 = sadd.s32 %s28, %s201
          %s203 = smul.addr %s202, 128
          %s204 = scalar_lea.hbm %s1, %s203
          %s205 = sshll.u32 %s197, 4
          %s206 = int_to_ptr.vmem [resolvable:$true] %s205
          %211 = dma.hbm_to_vmem [thread:$0]  %s204, 512, %s206, %s194, 128, 128, 8
        $region24: #{tpu_custom_call.1} parent=15 // pred_fallthru
          _
      $region16: #{tpu_custom_call.1} parent=5 // pred_fallthru
        _
      %p212 = scmp.le.s32.totalorder 1, %s19
      %p213 = scmp.lt.s32.totalorder %s19, 3
      %p214 = pnand %p212, %p213
      %p215 = pneg %p214
      // Predicated region
      $region25: #{tpu_custom_call.1} parent=5 // pred_check
        _
      $region26: #{tpu_custom_call.1} parent=5 // pred_check_branch
        %217 = sbr.rel (%p214) target = $region28
      $region27: #{tpu_custom_call.1} parent=5 // pred_region
        %s218 = ssub.s32 %s19, 1
        %s219 = sand.u32 %s53, 1
        %s220 = scalar_lea.sflag [#allocation4], %s219
        %s221 = sand.u32 %s53, 1
        %s222 = smul.addr %s221, 8
        %s223 = scalar_lea.vmem [#allocation3], %s222
        // Predicated region
        $region29: #{tpu_custom_call.1} parent=27 // pred_check
          %p224 = pneg %p66
        $region30: #{tpu_custom_call.1} parent=27 // pred_check_branch
          %226 = sbr.rel (%p224) target = $region32
        $region31: #{tpu_custom_call.1} parent=27 // pred_region
          %227 = dma.done %s220, 128
        $region32: #{tpu_custom_call.1} parent=27 // pred_fallthru
          _
        %s228 = sand.u32 %s81, 1
        %s229 = scalar_lea.sflag [#allocation7], %s228
        %s230 = sand.u32 %s81, 1
        %s231 = smul.addr %s230, 32
        %s232 = scalar_lea.vmem [#allocation6], %s231
        // Predicated region
        $region33: #{tpu_custom_call.1} parent=27 // pred_check
          %p233 = pneg %p94
        $region34: #{tpu_custom_call.1} parent=27 // pred_check_branch
          %235 = sbr.rel (%p233) target = $region36
        $region35: #{tpu_custom_call.1} parent=27 // pred_region
          %236 = dma.done %s229, 512
        $region36: #{tpu_custom_call.1} parent=27 // pred_fallthru
          _
        %s237 = sand.u32 %s53, 1
        %s238 = scalar_lea.sflag [#allocation4], %s237
        %s239 = sand.u32 %s53, 1
        %s240 = smul.addr %s239, 8
        %s241 = scalar_lea.vmem [#allocation3], %s240
        %p242 = pneg %p66
        %p243 = pneg %p63
        %s244 = sand.u32 %s81, 1
        %s245 = scalar_lea.sflag [#allocation7], %s244
        %s246 = sand.u32 %s81, 1
        %s247 = smul.addr %s246, 32
        %s248 = scalar_lea.vmem [#allocation6], %s247
        %p249 = pneg %p94
        %p250 = pneg %p91
        %p251 = pneg %p124
        %p252 = pneg %p121
        %s253 = sand.u32 %s111, 1
        %s254 = scalar_lea.sflag [#allocation5], %s253
        %s255 = sand.u32 %s111, 1
        %s256 = smul.addr %s255, 8
        %s257 = scalar_lea.vmem [#allocation8], %s256
        %p258 = pneg %p152
        %p259 = pneg %p149
        %p260 = scmp.lt.s32.totalorder %s29, 1
        %s261 = scalar_select %p260, %s29, 1
        %p262 = scmp.lt.s32.totalorder %s30, 0
        %s263 = scalar_select %p262, %s30, 0
        %s264 = sadd.s32 %s263, %s261
        %s265 = smul.addr %s264, 8
        %s266 = scalar_lea.vmem %s3, %s265
        %p267 = scmp.lt.s32.totalorder %s29, 1
        %s268 = scalar_select %p267, %s29, 1
        %p269 = scmp.lt.s32.totalorder %s30, 0
        %s270 = scalar_select %p269, %s30, 0
        %s271 = sadd.s32 %s270, %s268
        %s272 = smul.addr %s271, 8
        %s273 = scalar_lea.vmem %s3, %s272
        %p274 = scmp.eq.s32.totalorder %s31, 0
        // Predicated region
        $region37: #{tpu_custom_call.1} parent=27 // pred_check
          %p275 = pneg %p274
        $region38: #{tpu_custom_call.1} parent=27 // pred_check_branch
          %277 = sbr.rel (%p275) target = $region40
        $region39: #{tpu_custom_call.1} parent=27 // pred_region
          %vm278 = vcmask 7168
          %279 = vst.msk [vmem:[#allocation2] sm:$0xff] %vm278, -inf
        $region40: #{tpu_custom_call.1} parent=27 // pred_fallthru
          _
        %v280 = vld [vmem:[%s223] sm:$0xff]
        %v281 = vld [vmem:[%s232] sm:$0xff]
        %v282 = vld [vmem:[%s232 + $0x8] sm:$0xff]
        %v283 = vld [vmem:[%s232 + $0x10] sm:$0xff]
        %v284 = vld [vmem:[%s232 + $0x18] sm:$0xff]
        %286 = vset.pattern.permute.xlu0 0
        %287 = vperm.xlu0 %286, %v280
        %v288 = vpop.permute.xlu0 %287
        %v290 = vlaneseq
        %v291 = vshrl.u32 %v290, 7
        %v292 = vsub.s32 0, %v291
        %v293 = vrot.slane %v281, %v292
        %v294 = vsub.f32 %v288, %v293
        %v295 = vand.u32 2147483647, %v294
        %v296 = vadd.f32 %v295, 0.0
        %297 = vset.pattern.permute.xlu0 1
        %298 = vperm.xlu0 %297, %v280
        %v299 = vpop.permute.xlu0 %298
        %v301 = vlaneseq
        %v302 = vshrl.u32 %v301, 7
        %v303 = vsub.s32 1, %v302
        %v304 = vrot.slane %v281, %v303
        %v305 = vsub.f32 %v299, %v304
        %v306 = vand.u32 2147483647, %v305
        %v307 = vadd.f32 %v296, %v306
        %308 = vset.pattern.permute.xlu0 2
        %309 = vperm.xlu0 %308, %v280
        %v310 = vpop.permute.xlu0 %309
        %v312 = vlaneseq
        %v313 = vshrl.u32 %v312, 7
        %v314 = vsub.s32 2, %v313
        %v315 = vrot.slane %v281, %v314
        %v316 = vsub.f32 %v310, %v315
        %v317 = vand.u32 2147483647, %v316
        %v318 = vadd.f32 %v307, %v317
        %319 = vset.pattern.permute.xlu0 3
        %320 = vperm.xlu0 %319, %v280
        %v321 = vpop.permute.xlu0 %320
        %v323 = vlaneseq
        %v324 = vshrl.u32 %v323, 7
        %v325 = vsub.s32 3, %v324
        %v326 = vrot.slane %v281, %v325
        %v327 = vsub.f32 %v321, %v326
        %v328 = vand.u32 2147483647, %v327
        %v329 = vadd.f32 %v318, %v328
        %330 = vset.pattern.permute.xlu0 4
        %331 = vperm.xlu0 %330, %v280
        %v332 = vpop.permute.xlu0 %331
        %v334 = vlaneseq
        %v335 = vshrl.u32 %v334, 7
        %v336 = vsub.s32 4, %v335
        %v337 = vrot.slane %v281, %v336
        %v338 = vsub.f32 %v332, %v337
        %v339 = vand.u32 2147483647, %v338
        %v340 = vadd.f32 %v329, %v339
        %341 = vset.pattern.permute.xlu0 5
        %342 = vperm.xlu0 %341, %v280
        %v343 = vpop.permute.xlu0 %342
        %v345 = vlaneseq
        %v346 = vshrl.u32 %v345, 7
        %v347 = vsub.s32 5, %v346
        %v348 = vrot.slane %v281, %v347
        %v349 = vsub.f32 %v343, %v348
        %v350 = vand.u32 2147483647, %v349
        %v351 = vadd.f32 %v340, %v350
        %352 = vset.pattern.permute.xlu0 6
        %353 = vperm.xlu0 %352, %v280
        %v354 = vpop.permute.xlu0 %353
        %v356 = vlaneseq
        %v357 = vshrl.u32 %v356, 7
        %v358 = vsub.s32 6, %v357
        %v359 = vrot.slane %v281, %v358
        %v360 = vsub.f32 %v354, %v359
        %v361 = vand.u32 2147483647, %v360
        %v362 = vadd.f32 %v351, %v361
        %363 = vset.pattern.permute.xlu0 7
        %364 = vperm.xlu0 %363, %v280
        %v365 = vpop.permute.xlu0 %364
        %v367 = vlaneseq
        %v368 = vshrl.u32 %v367, 7
        %v369 = vsub.s32 7, %v368
        %v370 = vrot.slane %v281, %v369
        %v371 = vsub.f32 %v365, %v370
        %v372 = vand.u32 2147483647, %v371
        %v373 = vadd.f32 %v362, %v372
        %374 = vset.pattern.permute.xlu0 8
        %375 = vperm.xlu0 %374, %v280
        %v376 = vpop.permute.xlu0 %375
        %v378 = vlaneseq
        %v379 = vshrl.u32 %v378, 7
        %v380 = vsub.s32 0, %v379
        %v381 = vrot.slane %v282, %v380
        %v382 = vsub.f32 %v376, %v381
        %v383 = vand.u32 2147483647, %v382
        %v384 = vadd.f32 %v373, %v383
        %385 = vset.pattern.permute.xlu0 9
        %386 = vperm.xlu0 %385, %v280
        %v387 = vpop.permute.xlu0 %386
        %v389 = vlaneseq
        %v390 = vshrl.u32 %v389, 7
        %v391 = vsub.s32 1, %v390
        %v392 = vrot.slane %v282, %v391
        %v393 = vsub.f32 %v387, %v392
        %v394 = vand.u32 2147483647, %v393
        %v395 = vadd.f32 %v384, %v394
        %396 = vset.pattern.permute.xlu0 10
        %397 = vperm.xlu0 %396, %v280
        %v398 = vpop.permute.xlu0 %397
        %v400 = vlaneseq
        %v401 = vshrl.u32 %v400, 7
        %v402 = vsub.s32 2, %v401
        %v403 = vrot.slane %v282, %v402
        %v404 = vsub.f32 %v398, %v403
        %v405 = vand.u32 2147483647, %v404
        %v406 = vadd.f32 %v395, %v405
        %407 = vset.pattern.permute.xlu0 11
        %408 = vperm.xlu0 %407, %v280
        %v409 = vpop.permute.xlu0 %408
        %v411 = vlaneseq
        %v412 = vshrl.u32 %v411, 7
        %v413 = vsub.s32 3, %v412
        %v414 = vrot.slane %v282, %v413
        %v415 = vsub.f32 %v409, %v414
        %v416 = vand.u32 2147483647, %v415
        %v417 = vadd.f32 %v406, %v416
        %418 = vset.pattern.permute.xlu0 12
        %419 = vperm.xlu0 %418, %v280
        %v420 = vpop.permute.xlu0 %419
        %v422 = vlaneseq
        %v423 = vshrl.u32 %v422, 7
        %v424 = vsub.s32 4, %v423
        %v425 = vrot.slane %v282, %v424
        %v426 = vsub.f32 %v420, %v425
        %v427 = vand.u32 2147483647, %v426
        %v428 = vadd.f32 %v417, %v427
        %429 = vset.pattern.permute.xlu0 13
        %430 = vperm.xlu0 %429, %v280
        %v431 = vpop.permute.xlu0 %430
        %v433 = vlaneseq
        %v434 = vshrl.u32 %v433, 7
        %v435 = vsub.s32 5, %v434
        %v436 = vrot.slane %v282, %v435
        %v437 = vsub.f32 %v431, %v436
        %v438 = vand.u32 2147483647, %v437
        %v439 = vadd.f32 %v428, %v438
        %440 = vset.pattern.permute.xlu0 14
        %441 = vperm.xlu0 %440, %v280
        %v442 = vpop.permute.xlu0 %441
        %v444 = vlaneseq
        %v445 = vshrl.u32 %v444, 7
        %v446 = vsub.s32 6, %v445
        %v447 = vrot.slane %v282, %v446
        %v448 = vsub.f32 %v442, %v447
        %v449 = vand.u32 2147483647, %v448
        %v450 = vadd.f32 %v439, %v449
        %451 = vset.pattern.permute.xlu0 15
        %452 = vperm.xlu0 %451, %v280
        %v453 = vpop.permute.xlu0 %452
        %v455 = vlaneseq
        %v456 = vshrl.u32 %v455, 7
        %v457 = vsub.s32 7, %v456
        %v458 = vrot.slane %v282, %v457
        %v459 = vsub.f32 %v453, %v458
        %v460 = vand.u32 2147483647, %v459
        %v461 = vadd.f32 %v450, %v460
        %462 = vset.pattern.permute.xlu0 16
        %463 = vperm.xlu0 %462, %v280
        %v464 = vpop.permute.xlu0 %463
        %v466 = vlaneseq
        %v467 = vshrl.u32 %v466, 7
        %v468 = vsub.s32 0, %v467
        %v469 = vrot.slane %v283, %v468
        %v470 = vsub.f32 %v464, %v469
        %v471 = vand.u32 2147483647, %v470
        %v472 = vadd.f32 %v461, %v471
        %473 = vset.pattern.permute.xlu0 17
        %474 = vperm.xlu0 %473, %v280
        %v475 = vpop.permute.xlu0 %474
        %v477 = vlaneseq
        %v478 = vshrl.u32 %v477, 7
        %v479 = vsub.s32 1, %v478
        %v480 = vrot.slane %v283, %v479
        %v481 = vsub.f32 %v475, %v480
        %v482 = vand.u32 2147483647, %v481
        %v483 = vadd.f32 %v472, %v482
        %484 = vset.pattern.permute.xlu0 18
        %485 = vperm.xlu0 %484, %v280
        %v486 = vpop.permute.xlu0 %485
        %v488 = vlaneseq
        %v489 = vshrl.u32 %v488, 7
        %v490 = vsub.s32 2, %v489
        %v491 = vrot.slane %v283, %v490
        %v492 = vsub.f32 %v486, %v491
        %v493 = vand.u32 2147483647, %v492
        %v494 = vadd.f32 %v483, %v493
        %495 = vset.pattern.permute.xlu0 19
        %496 = vperm.xlu0 %495, %v280
        %v497 = vpop.permute.xlu0 %496
        %v499 = vlaneseq
        %v500 = vshrl.u32 %v499, 7
        %v501 = vsub.s32 3, %v500
        %v502 = vrot.slane %v283, %v501
        %v503 = vsub.f32 %v497, %v502
        %v504 = vand.u32 2147483647, %v503
        %v505 = vadd.f32 %v494, %v504
        %506 = vset.pattern.permute.xlu0 20
        %507 = vperm.xlu0 %506, %v280
        %v508 = vpop.permute.xlu0 %507
        %v510 = vlaneseq
        %v511 = vshrl.u32 %v510, 7
        %v512 = vsub.s32 4, %v511
        %v513 = vrot.slane %v283, %v512
        %v514 = vsub.f32 %v508, %v513
        %v515 = vand.u32 2147483647, %v514
        %v516 = vadd.f32 %v505, %v515
        %517 = vset.pattern.permute.xlu0 21
        %518 = vperm.xlu0 %517, %v280
        %v519 = vpop.permute.xlu0 %518
        %v521 = vlaneseq
        %v522 = vshrl.u32 %v521, 7
        %v523 = vsub.s32 5, %v522
        %v524 = vrot.slane %v283, %v523
        %v525 = vsub.f32 %v519, %v524
        %v526 = vand.u32 2147483647, %v525
        %v527 = vadd.f32 %v516, %v526
        %528 = vset.pattern.permute.xlu0 22
        %529 = vperm.xlu0 %528, %v280
        %v530 = vpop.permute.xlu0 %529
        %v532 = vlaneseq
        %v533 = vshrl.u32 %v532, 7
        %v534 = vsub.s32 6, %v533
        %v535 = vrot.slane %v283, %v534
        %v536 = vsub.f32 %v530, %v535
        %v537 = vand.u32 2147483647, %v536
        %v538 = vadd.f32 %v527, %v537
        %539 = vset.pattern.permute.xlu0 23
        %540 = vperm.xlu0 %539, %v280
        %v541 = vpop.permute.xlu0 %540
        %v543 = vlaneseq
        %v544 = vshrl.u32 %v543, 7
        %v545 = vsub.s32 7, %v544
        %v546 = vrot.slane %v283, %v545
        %v547 = vsub.f32 %v541, %v546
        %v548 = vand.u32 2147483647, %v547
        %v549 = vadd.f32 %v538, %v548
        %550 = vset.pattern.permute.xlu0 24
        %551 = vperm.xlu0 %550, %v280
        %v552 = vpop.permute.xlu0 %551
        %v554 = vlaneseq
        %v555 = vshrl.u32 %v554, 7
        %v556 = vsub.s32 0, %v555
        %v557 = vrot.slane %v284, %v556
        %v558 = vsub.f32 %v552, %v557
        %v559 = vand.u32 2147483647, %v558
        %v560 = vadd.f32 %v549, %v559
        %561 = vset.pattern.permute.xlu0 25
        %562 = vperm.xlu0 %561, %v280
        %v563 = vpop.permute.xlu0 %562
        %v565 = vlaneseq
        %v566 = vshrl.u32 %v565, 7
        %v567 = vsub.s32 1, %v566
        %v568 = vrot.slane %v284, %v567
        %v569 = vsub.f32 %v563, %v568
        %v570 = vand.u32 2147483647, %v569
        %v571 = vadd.f32 %v560, %v570
        %572 = vset.pattern.permute.xlu0 26
        %573 = vperm.xlu0 %572, %v280
        %v574 = vpop.permute.xlu0 %573
        %v576 = vlaneseq
        %v577 = vshrl.u32 %v576, 7
        %v578 = vsub.s32 2, %v577
        %v579 = vrot.slane %v284, %v578
        %v580 = vsub.f32 %v574, %v579
        %v581 = vand.u32 2147483647, %v580
        %v582 = vadd.f32 %v571, %v581
        %583 = vset.pattern.permute.xlu0 27
        %584 = vperm.xlu0 %583, %v280
        %v585 = vpop.permute.xlu0 %584
        %v587 = vlaneseq
        %v588 = vshrl.u32 %v587, 7
        %v589 = vsub.s32 3, %v588
        %v590 = vrot.slane %v284, %v589
        %v591 = vsub.f32 %v585, %v590
        %v592 = vand.u32 2147483647, %v591
        %v593 = vadd.f32 %v582, %v592
        %594 = vset.pattern.permute.xlu0 28
        %595 = vperm.xlu0 %594, %v280
        %v596 = vpop.permute.xlu0 %595
        %v598 = vlaneseq
        %v599 = vshrl.u32 %v598, 7
        %v600 = vsub.s32 4, %v599
        %v601 = vrot.slane %v284, %v600
        %v602 = vsub.f32 %v596, %v601
        %v603 = vand.u32 2147483647, %v602
        %v604 = vadd.f32 %v593, %v603
        %605 = vset.pattern.permute.xlu0 29
        %606 = vperm.xlu0 %605, %v280
        %v607 = vpop.permute.xlu0 %606
        %v609 = vlaneseq
        %v610 = vshrl.u32 %v609, 7
        %v611 = vsub.s32 5, %v610
        %v612 = vrot.slane %v284, %v611
        %v613 = vsub.f32 %v607, %v612
        %v614 = vand.u32 2147483647, %v613
        %v615 = vadd.f32 %v604, %v614
        %616 = vset.pattern.permute.xlu0 30
        %617 = vperm.xlu0 %616, %v280
        %v618 = vpop.permute.xlu0 %617
        %v620 = vlaneseq
        %v621 = vshrl.u32 %v620, 7
        %v622 = vsub.s32 6, %v621
        %v623 = vrot.slane %v284, %v622
        %v624 = vsub.f32 %v618, %v623
        %v625 = vand.u32 2147483647, %v624
        %v626 = vadd.f32 %v615, %v625
        %627 = vset.pattern.permute.xlu0 31
        %628 = vperm.xlu0 %627, %v280
        %v629 = vpop.permute.xlu0 %628
        %v631 = vlaneseq
        %v632 = vshrl.u32 %v631, 7
        %v633 = vsub.s32 7, %v632
        %v634 = vrot.slane %v284, %v633
        %v635 = vsub.f32 %v629, %v634
        %v636 = vand.u32 2147483647, %v635
        %v637 = vadd.f32 %v626, %v636
        %v638 = vmul.f32 %v637, 0.03125
        %v639 = vsub.f32 0.0, %v638
        %640 = vst [vmem:[%s257] sm:$0xff] %v639
        %s641 = smul.u32 %s31, 128
        %v642 = vlaneseq
        %v643 = vand.u32 %v642, 127
        %v644 = vstv %s641
        %v645 = vadd.s32 %v644, %v643
        %vm646 = vcmp.lt.s32.totalorder %v645, 16
        %v647 = vsel %vm646, %v639, -inf
        %v648 = vld [vmem:[#allocation2] sm:$0xff]
        %649 = vmax.xlane.f32.xlu0 %v647
        %v650 = vpop.xlane.xlu0 %649
        %v651 = vmax.f32 %v648, %v650
        %vm652 = vcmask 7168
        %653 = vst.msk [vmem:[#allocation2] sm:$0xff] %vm652, %v651
        // Predicated region
        $region41: #{tpu_custom_call.1} parent=27 // pred_check
          %p654 = pneg %p274
        $region42: #{tpu_custom_call.1} parent=27 // pred_check_branch
          %656 = sbr.rel (%p654) target = $region44
        $region43: #{tpu_custom_call.1} parent=27 // pred_region
          %v657 = vld [vmem:[#allocation2] sm:$0xff]
          %658 = vst.msk [vmem:[%s273] sm:$0xff] %vm652, %v657
        $region44: #{tpu_custom_call.1} parent=27 // pred_fallthru
          _
        %s659 = sand.u32 %s111, 1
        %s660 = scalar_lea.sflag [#allocation5], %s659
        %s661 = sand.u32 %s111, 1
        %s662 = smul.addr %s661, 8
        %s663 = scalar_lea.vmem [#allocation8], %s662
        %p664 = scmp.lt.s32.totalorder %s29, 1
        %s665 = scalar_select %p664, %s29, 1
        %p666 = scmp.lt.s32.totalorder %s30, 0
        %s667 = scalar_select %p666, %s30, 0
        %s668 = sadd.s32 %s667, %s665
        %s669 = smul.addr %s668, 8
        %s670 = scalar_lea.vmem %s3, %s669
        // Predicated region
        $region45: #{tpu_custom_call.1} parent=27 // pred_check
          %p671 = pneg %p121
        $region46: #{tpu_custom_call.1} parent=27 // pred_check_branch
          %673 = sbr.rel (%p671) target = $region48
        $region47: #{tpu_custom_call.1} parent=27 // pred_region
          %s675 = ssub.s32 128, 128
          %676 = vsyncadd %s660, %s675
          %s677 = sadd.s32 %s31, %s30
          %s678 = sadd.s32 %s677, %s29
          %s679 = smul.addr %s678, 128
          %s680 = scalar_lea.hbm %s2, %s679
          %s682 = sshll.u32 %s663, 4
          %s683 = int_to_ptr.vmem [resolvable:$true] %s682
          %685 = dma.vmem_to_hbm [thread:$0]  %s683, 128, %s680, %s660
        $region48: #{tpu_custom_call.1} parent=27 // pred_fallthru
          _
        // Predicated region
        $region49: #{tpu_custom_call.1} parent=27 // pred_check
          %p686 = pneg %p149
        $region50: #{tpu_custom_call.1} parent=27 // pred_check_branch
          %688 = sbr.rel (%p686) target = $region52
        $region51: #{tpu_custom_call.1} parent=27 // pred_region
          _
        $region52: #{tpu_custom_call.1} parent=27 // pred_fallthru
          _
      $region28: #{tpu_custom_call.1} parent=5 // pred_fallthru
        _
      %p689 = scmp.le.s32.totalorder 2, %s19
      // Predicated region
      $region53: #{tpu_custom_call.1} parent=5 // pred_check
        %p690 = pneg %p689
      $region54: #{tpu_custom_call.1} parent=5 // pred_check_branch
        %692 = sbr.rel (%p690) target = $region56
      $region55: #{tpu_custom_call.1} parent=5 // pred_region
        %s693 = ssub.s32 %s19, 2
        // Predicated region
        $region57: #{tpu_custom_call.1} parent=55 // pred_check
          %p694 = pneg %p127
        $region58: #{tpu_custom_call.1} parent=55 // pred_check_branch
          %696 = sbr.rel (%p694) target = $region60
        $region59: #{tpu_custom_call.1} parent=55 // pred_region
          %s697 = sand.u32 %s112, 1
          %s698 = scalar_lea.sflag [#allocation5], %s697
          %s699 = sand.u32 %s112, 1
          %s700 = smul.addr %s699, 8
          %s701 = scalar_lea.vmem [#allocation8], %s700
          %702 = dma.done %s698, 128
        $region60: #{tpu_custom_call.1} parent=55 // pred_fallthru
          _
        // Predicated region
        $region61: #{tpu_custom_call.1} parent=55 // pred_check
          %p703 = pneg %p155
        $region62: #{tpu_custom_call.1} parent=55 // pred_check_branch
          %705 = sbr.rel (%p703) target = $region64
        $region63: #{tpu_custom_call.1} parent=55 // pred_region
          %p706 = scmp.lt.s32.totalorder %s32, 1
          %s707 = scalar_select %p706, %s32, 1
          %p708 = scmp.lt.s32.totalorder %s33, 0
          %s709 = scalar_select %p708, %s33, 0
          %s710 = sadd.s32 %s709, %s707
          %s711 = smul.addr %s710, 8
          %s712 = scalar_lea.vmem %s3, %s711
        $region64: #{tpu_custom_call.1} parent=55 // pred_fallthru
          _
      $region56: #{tpu_custom_call.1} parent=5 // pred_fallthru
        _
    $region6: #{tpu_custom_call.1} parent=1 // loop_footer
      %s23 = sadd.s32 1, %s19
    $region7: #{tpu_custom_call.1} parent=1 // loop_footer_branch
      %18 = sbr.rel target = $region3
    $region8: #{tpu_custom_call.1} parent=1 // loop_exit
      _
    %713 = vsyncpa [#allocation4], 1
    %s714 = scalar_lea.sflag [#allocation4], 1
    %715 = vsyncpa %s714, 1
    %716 = vsyncpa [#allocation7], 1
    %s717 = scalar_lea.sflag [#allocation7], 1
    %718 = vsyncpa %s717, 1
    %719 = vsyncpa [#allocation5], 1
    %s720 = scalar_lea.sflag [#allocation5], 1
    %721 = vsyncpa %s720, 1

</llo_original>
